<compile_context>
chip_gen: v6e
topology: v6e:2x2x1
jax: 0.10.0
libtpu: 0.0.40
codegen_flags: <defaults>
</compile_context>

<pallas_src>
import functools

import jax
import jax.numpy as jnp
from jax.experimental import pallas as pl
from jax.experimental.pallas import tpu as pltpu


def _round_up(n, m):
    return ((n + m - 1) // m) * m


def padded_dims(state_dim, action_dim, hidden_size, param_dtype=jnp.bfloat16):
    """Derive every padded dimension / slab offset in ONE place."""
    h2 = hidden_size // 2
    dt = jnp.dtype(param_dtype)
    sub = 8 * max(1, 4 // dt.itemsize)          # native sublane tile rows
    S_p = _round_up(state_dim, 128)             # fc1 K
    H_p = _round_up(hidden_size, 128)           # fc1/fc2 N, fc2/fc3 K
    H2_p = _round_up(h2, 128)                   # fc3 N, head K
    A2_p = _round_up(2 * action_dim, 128)       # fused head N == output width
    W_max = max(H_p, H2_p, A2_p)
    bias_base = S_p + 2 * H_p + H2_p            # rows occupied by weights
    slab_rows = bias_base + 4 * sub             # + one aligned block per bias
    return dict(state_dim=state_dim, action_dim=action_dim,
                hidden_size=hidden_size, h2=h2,
                S_p=S_p, H_p=H_p, H2_p=H2_p, A2_p=A2_p, W_max=W_max,
                bias_base=bias_base, bias_stride=sub, slab_rows=slab_rows,
                param_dtype=dt)


def _policy_kernel(x_ref, p_ref, out_ref, *, dims, action_dim,
                   log_std_min, log_std_max):
    S_p, H_p, H2_p, A2_p = dims["S_p"], dims["H_p"], dims["H2_p"], dims["A2_p"]
    bias_base, sub = dims["bias_base"], dims["bias_stride"]
    pdt = dims["param_dtype"]

    def leaky_relu(v):
        # F.leaky_relu(v, 0.01) as a single VALU max per vreg (f32 epilogue).
        return jnp.maximum(v, 0.01 * v)

    def bias(i, n):
        r = bias_base + i * sub                 # tile-aligned row block
        return p_ref[r:r + 1, :n].astype(jnp.float32)

    # Static, tile-aligned views into the packed parameter slab (zero cost).
    w1 = p_ref[0:S_p, :H_p]
    w2 = p_ref[S_p:S_p + H_p, :H_p]
    w3 = p_ref[S_p + H_p:S_p + 2 * H_p, :H2_p]
    wh = p_ref[S_p + 2 * H_p:S_p + 2 * H_p + H2_p, :A2_p]   # [w_mu | w_log_std]

    x = x_ref[...]                               # already param_dtype (bf16)
    h = leaky_relu(jnp.dot(x, w1, preferred_element_type=jnp.float32)
                   + bias(0, H_p))
    h = leaky_relu(jnp.dot(h.astype(pdt), w2,
                           preferred_element_type=jnp.float32) + bias(1, H_p))
    h = leaky_relu(jnp.dot(h.astype(pdt), w3,
                           preferred_element_type=jnp.float32) + bias(2, H2_p))

    # Single fused head matmul: cols [0, A) = mu, [A, 2A) = log_std, rest pad.
    y = jnp.dot(h.astype(pdt), wh,
                preferred_element_type=jnp.float32) + bias(3, A2_p)

    # Clamp only the log_std half; mask built as one (1, A2_p) row, broadcast.
    col = jax.lax.broadcasted_iota(jnp.int32, (1, A2_p), 1)
    is_log_std = (col >= action_dim) & (col < 2 * action_dim)
    y = jnp.where(is_log_std, jnp.clip(y, log_std_min, log_std_max), y)

    out_ref[...] = y                             # lane-dense 128-wide f32 store


def pack_params(params, dims):
    """Pack all weights/biases into ONE (slab_rows, W_max) param_dtype slab.

    Per-layer padded blocks, fused mu/log_std head, each bias in its own
    tile-aligned row block.  Do this ONCE outside the rollout loop.
    """
    W_max = dims["W_max"]
    sub = dims["bias_stride"]

    def pad_block(a, rows):
        a = jnp.asarray(a, jnp.float32)
        out = jnp.zeros((rows, W_max), jnp.float32)
        return out.at[:a.shape[0], :a.shape[1]].set(a)

    w_head = jnp.concatenate([params["w_mu"], params["w_log_std"]], axis=1)
    b_head = jnp.concatenate([jnp.reshape(params["b_mu"], (1, -1)),
                              jnp.reshape(params["b_log_std"], (1, -1))],
                             axis=1)

    packed = jnp.concatenate([
        pad_block(params["w1"], dims["S_p"]),
        pad_block(params["w2"], dims["H_p"]),
        pad_block(params["w3"], dims["H_p"]),
        pad_block(w_head, dims["H2_p"]),
        pad_block(jnp.reshape(params["b1"], (1, -1)), sub),
        pad_block(jnp.reshape(params["b2"], (1, -1)), sub),
        pad_block(jnp.reshape(params["b3"], (1, -1)), sub),
        pad_block(b_head, sub),
    ], axis=0).astype(dims["param_dtype"])
    assert packed.shape == (dims["slab_rows"], W_max)
    return packed


def _choose_batch_tile(batch, dims, vmem_budget_bytes=24 << 20, max_tb=1024):
    """Largest batch tile (multiple of the dtype sublane tile, <= 1024) that
    fits a conservative VMEM budget and evenly covers the batch."""
    dt = dims["param_dtype"]
    g = dims["bias_stride"]
    in_row = dims["S_p"] * dt.itemsize
    out_row = dims["A2_p"] * 4
    slab = dims["slab_rows"] * dims["W_max"] * dt.itemsize

    def fits(t):  # conservative: slab counted double-buffered (fallback case)
        return 2 * slab + 2 * t * in_row + 2 * t * out_row <= vmem_budget_bytes

    cap = max_tb
    while cap > g and not fits(cap):
        cap -= g
    rb = _round_up(batch, g)
    tb = min(cap, rb)
    if rb > cap:                       # split batch evenly across grid steps
        n = -(-rb // cap)
        tb = min(cap, _round_up(-(-batch // n), g))
    n_steps = -(-batch // tb)
    return tb, tb * n_steps


def policy_forward(x, packed, dims, *, log_std_min=-10.0, log_std_max=2.0):
    """Full MLP forward in a single Pallas kernel, gridded over the batch."""
    batch = x.shape[0]
    dt = dims["param_dtype"]
    S_p, A2_p = dims["S_p"], dims["A2_p"]
    action_dim = dims["action_dim"]
    TB, padded_batch = _choose_batch_tile(batch, dims)

    # Cast + pad only the fringe (no zeros + dynamic-update-slice full pass).
    x_pad = jnp.pad(x.astype(dt),
                    ((0, padded_batch - batch), (0, S_p - dims["state_dim"])))

    kernel = functools.partial(
        _policy_kernel, dims=dims, action_dim=action_dim,
        log_std_min=float(log_std_min), log_std_max=float(log_std_max))

    def call(param_pipeline_mode):
        p_kwargs = {}
        if param_pipeline_mode is not None:
            p_kwargs["pipeline_mode"] = param_pipeline_mode
        return pl.pallas_call(
            kernel,
            out_shape=jax.ShapeDtypeStruct((padded_batch, A2_p), jnp.float32),
            grid=(padded_batch // TB,),
            in_specs=[
                # Activations stream per grid step.
                pl.BlockSpec((TB, S_p), lambda i: (i, 0)),
                # Constant index_map: params DMA'd once, VMEM-resident.
                pl.BlockSpec((dims["slab_rows"], dims["W_max"]),
                             lambda i: (0, 0), **p_kwargs),
            ],
            out_specs=pl.BlockSpec((TB, A2_p), lambda i: (i, 0)),
            compiler_params=pltpu.CompilerParams(
                dimension_semantics=("parallel",),
                vmem_limit_bytes=32 * 1024 * 1024),
        )(x_pad, packed)

    try:
        # Single-buffer the constant weight slab (halves its VMEM footprint).
        out = call(pl.Buffered(1))
    except Exception:
        # Some JAX builds require >=2 buffers per pipelined operand; the
        # constant index_map still elides re-DMA, only the footprint doubles.
        out = call(None)

    mu = out[:batch, :action_dim]
    log_std = out[:batch, action_dim:2 * action_dim]
    return mu, log_std


def init_params(key, state_dim, action_dim, hidden_size, init_w=0.003):
    """Mirrors PolicyNetwork.__init__: every layer uniform(-init_w, init_w).
    Linear weights stored transposed: (in_features, out_features)."""
    def uni(k, shape):
        return jax.random.uniform(k, shape, jnp.float32,
                                  minval=-init_w, maxval=init_w)

    ks = jax.random.split(key, 10)
    h2 = hidden_size // 2
    return {
        "w1": uni(ks[0], (state_dim, hidden_size)),
        "b1": uni(ks[1], (1, hidden_size)),
        "w2": uni(ks[2], (hidden_size, hidden_size)),
        "b2": uni(ks[3], (1, hidden_size)),
        "w3": uni(ks[4], (hidden_size, h2)),
        "b3": uni(ks[5], (1, h2)),
        "w_mu": uni(ks[6], (h2, action_dim)),
        "b_mu": uni(ks[7], (1, action_dim)),
        "w_log_std": uni(ks[8], (h2, action_dim)),
        "b_log_std": uni(ks[9], (1, action_dim)),
    }


def reference_forward(x, params, compute_dtype=jnp.float32,
                      log_std_min=-10.0, log_std_max=2.0):
    """Pure-JAX reference; emulates the kernel's matmul-operand rounding."""
    def c(v):
        return jnp.asarray(v).astype(compute_dtype).astype(jnp.float32)

    def leaky(v):
        return jnp.maximum(v, 0.01 * v)

    h = leaky(c(x) @ c(params["w1"]) + c(params["b1"]))
    h = leaky(c(h) @ c(params["w2"]) + c(params["b2"]))
    h = leaky(c(h) @ c(params["w3"]) + c(params["b3"]))
    mu = c(h) @ c(params["w_mu"]) + c(params["b_mu"])
    ls = jnp.clip(c(h) @ c(params["w_log_std"]) + c(params["b_log_std"]),
                  log_std_min, log_std_max)
    return mu, ls


if __name__ == "__main__":
    key = jax.random.PRNGKey(0)
    k_x, k_p = jax.random.split(key)

    batch = 2
    state_dim = 8
    action_dim = 2
    hidden_size = 32

    x = jax.random.normal(k_x, (batch, state_dim), dtype=jnp.float32)
    params = init_params(k_p, state_dim, action_dim, hidden_size)

    # One-time dim derivation + parameter packing (outside any rollout loop).
    dims = padded_dims(state_dim, action_dim, hidden_size,
                       param_dtype=jnp.bfloat16)
    packed = pack_params(params, dims)

    mu, log_std = policy_forward(x, packed, dims)
    jax.block_until_ready((mu, log_std))

    mu_ref, ls_ref = reference_forward(x, params, compute_dtype=jnp.bfloat16)
    assert mu.shape == (batch, action_dim) and log_std.shape == (batch, action_dim)
    assert jnp.allclose(mu, mu_ref, atol=1e-4), "mu mismatch vs reference"
    assert jnp.allclose(log_std, ls_ref, atol=1e-4), "log_std mismatch vs reference"

    # TODO(synk): PolicyNetwork.sample (Normal rsample / tanh squash / log_prob,
    # action_scale/action_bias) is host-side distribution logic and is
    # intentionally not part of this forward kernel.
    print("KERNEL_OK")
</pallas_src>

<mosaic_0001>
module attributes {stable_mosaic.version = 11 : i64} {
  func.func @_policy_kernel(%arg0: i32, %arg1: memref<16x128xbf16, #tpu.memory_space<vmem>>, %arg2: memref<576x128xbf16, #tpu.memory_space<vmem>>, %arg3: memref<16x128xf32, #tpu.memory_space<vmem>>) attributes {dimension_semantics = [#tpu.dimension_semantics<parallel>], iteration_bounds = array<i64: 1>, scalar_prefetch = 0 : i64, scratch_operands = 0 : i64, tpu.core_type = #tpu.core_type<tc>, window_params = [{transform_indices = @transform_0, window_bounds = array<i64: 16, 128>}, {pipeline_mode = #tpu.pipeline_mode<synchronous>, transform_indices = @transform_1, window_bounds = array<i64: 576, 128>}, {transform_indices = @transform_2, window_bounds = array<i64: 16, 128>}]} {
    %c0 = arith.constant 0 : index
    %c0_0 = arith.constant 0 : index
    %0 = vector.load %arg2[%c0, %c0_0] : memref<576x128xbf16, #tpu.memory_space<vmem>>, vector<128x128xbf16>
    %c128 = arith.constant 128 : index
    %c0_1 = arith.constant 0 : index
    %1 = vector.load %arg2[%c128, %c0_1] : memref<576x128xbf16, #tpu.memory_space<vmem>>, vector<128x128xbf16>
    %c256 = arith.constant 256 : index
    %c0_2 = arith.constant 0 : index
    %2 = vector.load %arg2[%c256, %c0_2] : memref<576x128xbf16, #tpu.memory_space<vmem>>, vector<128x128xbf16>
    %c384 = arith.constant 384 : index
    %c0_3 = arith.constant 0 : index
    %3 = vector.load %arg2[%c384, %c0_3] : memref<576x128xbf16, #tpu.memory_space<vmem>>, vector<128x128xbf16>
    %c0_4 = arith.constant 0 : index
    %c0_5 = arith.constant 0 : index
    %4 = vector.load %arg1[%c0_4, %c0_5] : memref<16x128xbf16, #tpu.memory_space<vmem>>, vector<16x128xbf16>
    %cst = arith.constant dense<0.000000e+00> : vector<16x128xf32>
    %5 = tpu.matmul %4, %0, %cst {dimension_numbers = #tpu.dot_dimension_numbers<[1], [0], [0], [1], [0, 0, 1, 1], [], []>} : vector<16x128xbf16>, vector<128x128xbf16>, vector<16x128xf32> -> vector<16x128xf32>
    %c512 = arith.constant 512 : index
    %c0_6 = arith.constant 0 : index
    %6 = vector.load %arg2[%c512, %c0_6] : memref<576x128xbf16, #tpu.memory_space<vmem>>, vector<1x128xbf16>
    %7 = arith.extf %6 : vector<1x128xbf16> to vector<1x128xf32>
    %8 = vector.broadcast %7 : vector<1x128xf32> to vector<16x128xf32>
    %9 = arith.addf %5, %8 : vector<16x128xf32>
    %cst_7 = arith.constant 0.00999999977 : f32
    %10 = vector.broadcast %cst_7 : f32 to vector<16x128xf32>
    %11 = arith.mulf %10, %9 : vector<16x128xf32>
    %12 = arith.maximumf %9, %11 : vector<16x128xf32>
    %13 = arith.truncf %12 : vector<16x128xf32> to vector<16x128xbf16>
    %cst_8 = arith.constant dense<0.000000e+00> : vector<16x128xf32>
    %14 = tpu.matmul %13, %1, %cst_8 {dimension_numbers = #tpu.dot_dimension_numbers<[1], [0], [0], [1], [0, 0, 1, 1], [], []>} : vector<16x128xbf16>, vector<128x128xbf16>, vector<16x128xf32> -> vector<16x128xf32>
    %c528 = arith.constant 528 : index
    %c0_9 = arith.constant 0 : index
    %15 = vector.load %arg2[%c528, %c0_9] : memref<576x128xbf16, #tpu.memory_space<vmem>>, vector<1x128xbf16>
    %16 = arith.extf %15 : vector<1x128xbf16> to vector<1x128xf32>
    %17 = vector.broadcast %16 : vector<1x128xf32> to vector<16x128xf32>
    %18 = arith.addf %14, %17 : vector<16x128xf32>
    %cst_10 = arith.constant 0.00999999977 : f32
    %19 = vector.broadcast %cst_10 : f32 to vector<16x128xf32>
    %20 = arith.mulf %19, %18 : vector<16x128xf32>
    %21 = arith.maximumf %18, %20 : vector<16x128xf32>
    %22 = arith.truncf %21 : vector<16x128xf32> to vector<16x128xbf16>
    %cst_11 = arith.constant dense<0.000000e+00> : vector<16x128xf32>
    %23 = tpu.matmul %22, %2, %cst_11 {dimension_numbers = #tpu.dot_dimension_numbers<[1], [0], [0], [1], [0, 0, 1, 1], [], []>} : vector<16x128xbf16>, vector<128x128xbf16>, vector<16x128xf32> -> vector<16x128xf32>
    %c544 = arith.constant 544 : index
    %c0_12 = arith.constant 0 : index
    %24 = vector.load %arg2[%c544, %c0_12] : memref<576x128xbf16, #tpu.memory_space<vmem>>, vector<1x128xbf16>
    %25 = arith.extf %24 : vector<1x128xbf16> to vector<1x128xf32>
    %26 = vector.broadcast %25 : vector<1x128xf32> to vector<16x128xf32>
    %27 = arith.addf %23, %26 : vector<16x128xf32>
    %cst_13 = arith.constant 0.00999999977 : f32
    %28 = vector.broadcast %cst_13 : f32 to vector<16x128xf32>
    %29 = arith.mulf %28, %27 : vector<16x128xf32>
    %30 = arith.maximumf %27, %29 : vector<16x128xf32>
    %31 = arith.truncf %30 : vector<16x128xf32> to vector<16x128xbf16>
    %cst_14 = arith.constant dense<0.000000e+00> : vector<16x128xf32>
    %32 = tpu.matmul %31, %3, %cst_14 {dimension_numbers = #tpu.dot_dimension_numbers<[1], [0], [0], [1], [0, 0, 1, 1], [], []>} : vector<16x128xbf16>, vector<128x128xbf16>, vector<16x128xf32> -> vector<16x128xf32>
    %c560 = arith.constant 560 : index
    %c0_15 = arith.constant 0 : index
    %33 = vector.load %arg2[%c560, %c0_15] : memref<576x128xbf16, #tpu.memory_space<vmem>>, vector<1x128xbf16>
    %34 = arith.extf %33 : vector<1x128xbf16> to vector<1x128xf32>
    %35 = vector.broadcast %34 : vector<1x128xf32> to vector<16x128xf32>
    %36 = arith.addf %32, %35 : vector<16x128xf32>
    %37 = tpu.iota {dimensions = array<i32: 1>} : vector<1x128xi32>
    %c2_i32 = arith.constant 2 : i32
    %38 = vector.broadcast %c2_i32 : i32 to vector<1x128xi32>
    %39 = arith.cmpi sge, %37, %38 : vector<1x128xi32>
    %c4_i32 = arith.constant 4 : i32
    %40 = vector.broadcast %c4_i32 : i32 to vector<1x128xi32>
    %41 = arith.cmpi slt, %37, %40 : vector<1x128xi32>
    %42 = arith.andi %39, %41 : vector<1x128xi1>
    %cst_16 = arith.constant -1.000000e+01 : f32
    %cst_17 = arith.constant 2.000000e+00 : f32
    %43 = vector.broadcast %cst_16 : f32 to vector<16x128xf32>
    %44 = arith.maximumf %43, %36 : vector<16x128xf32>
    %45 = vector.broadcast %cst_17 : f32 to vector<16x128xf32>
    %46 = arith.minimumf %45, %44 : vector<16x128xf32>
    %47 = vector.shape_cast %42 : vector<1x128xi1> to vector<1x128xi1>
    %48 = vector.broadcast %47 : vector<1x128xi1> to vector<16x128xi1>
    %49 = arith.select %48, %46, %36 : vector<16x128xi1>, vector<16x128xf32>
    %c0_18 = arith.constant 0 : index
    %c0_19 = arith.constant 0 : index
    %50 = vector.load %arg3[%c0_18, %c0_19] : memref<16x128xf32, #tpu.memory_space<vmem>>, vector<16x128xf32>
    tpu.vector_store %arg3[%c0_18, %c0_19], %49 {strides = array<i32>} : memref<16x128xf32, #tpu.memory_space<vmem>>, vector<16x128xf32>,
    return
  }
  func.func @transform_0(%arg0: i32) -> (i32, i32) {
    %c0_i32 = arith.constant 0 : i32
    %c0_i32_0 = arith.constant 0 : i32
    return %arg0, %c0_i32 : i32, i32
  }
  func.func @transform_1(%arg0: i32) -> (i32, i32) {
    %c0_i32 = arith.constant 0 : i32
    %c0_i32_0 = arith.constant 0 : i32
    %c0_i32_1 = arith.constant 0 : i32
    return %c0_i32, %c0_i32_0 : i32, i32
  }
  func.func @transform_2(%arg0: i32) -> (i32, i32) {
    %c0_i32 = arith.constant 0 : i32
    %c0_i32_0 = arith.constant 0 : i32
    return %arg0, %c0_i32 : i32, i32
  }
}

module attributes {stable_mosaic.version = 11 : i64} {
  func.func @_policy_kernel(%arg0: i32, %arg1: memref<16x128xbf16, #tpu.memory_space<vmem>>, %arg2: memref<576x128xbf16, #tpu.memory_space<vmem>>, %arg3: memref<16x128xf32, #tpu.memory_space<vmem>>) attributes {dimension_semantics = [#tpu.dimension_semantics<parallel>], iteration_bounds = array<i64: 1>, scalar_prefetch = 0 : i64, scratch_operands = 0 : i64, tpu.core_type = #tpu.core_type<tc>, window_params = [{transform_indices = @transform_0, window_bounds = array<i64: 16, 128>}, {pipeline_mode = #tpu.pipeline_mode<synchronous>, transform_indices = @transform_1, window_bounds = array<i64: 576, 128>}, {transform_indices = @transform_2, window_bounds = array<i64: 16, 128>}]} {
    %c0 = arith.constant 0 : index
    %c0_0 = arith.constant 0 : index
    %0 = vector.load %arg2[%c0, %c0_0] : memref<576x128xbf16, #tpu.memory_space<vmem>>, vector<128x128xbf16>
    %c128 = arith.constant 128 : index
    %c0_1 = arith.constant 0 : index
    %1 = vector.load %arg2[%c128, %c0_1] : memref<576x128xbf16, #tpu.memory_space<vmem>>, vector<128x128xbf16>
    %c256 = arith.constant 256 : index
    %c0_2 = arith.constant 0 : index
    %2 = vector.load %arg2[%c256, %c0_2] : memref<576x128xbf16, #tpu.memory_space<vmem>>, vector<128x128xbf16>
    %c384 = arith.constant 384 : index
    %c0_3 = arith.constant 0 : index
    %3 = vector.load %arg2[%c384, %c0_3] : memref<576x128xbf16, #tpu.memory_space<vmem>>, vector<128x128xbf16>
    %c0_4 = arith.constant 0 : index
    %c0_5 = arith.constant 0 : index
    %4 = vector.load %arg1[%c0_4, %c0_5] : memref<16x128xbf16, #tpu.memory_space<vmem>>, vector<16x128xbf16>
    %cst = arith.constant dense<0.000000e+00> : vector<16x128xf32>
    %5 = tpu.matmul %4, %0, %cst {dimension_numbers = #tpu.dot_dimension_numbers<[1], [0], [0], [1], [0, 0, 1, 1], [], []>} : vector<16x128xbf16>, vector<128x128xbf16>, vector<16x128xf32> -> vector<16x128xf32>
    %c512 = arith.constant 512 : index
    %c0_6 = arith.constant 0 : index
    %6 = vector.load %arg2[%c512, %c0_6] : memref<576x128xbf16, #tpu.memory_space<vmem>>, vector<1x128xbf16>
    %7 = arith.extf %6 : vector<1x128xbf16> to vector<1x128xf32>
    %8 = vector.broadcast %7 : vector<1x128xf32> to vector<16x128xf32>
    %9 = arith.addf %5, %8 : vector<16x128xf32>
    %cst_7 = arith.constant 0.00999999977 : f32
    %10 = vector.broadcast %cst_7 : f32 to vector<16x128xf32>
    %11 = arith.mulf %10, %9 : vector<16x128xf32>
    %12 = arith.maximumf %9, %11 : vector<16x128xf32>
    %13 = arith.truncf %12 : vector<16x128xf32> to vector<16x128xbf16>
    %cst_8 = arith.constant dense<0.000000e+00> : vector<16x128xf32>
    %14 = tpu.matmul %13, %1, %cst_8 {dimension_numbers = #tpu.dot_dimension_numbers<[1], [0], [0], [1], [0, 0, 1, 1], [], []>} : vector<16x128xbf16>, vector<128x128xbf16>, vector<16x128xf32> -> vector<16x128xf32>
    %c528 = arith.constant 528 : index
    %c0_9 = arith.constant 0 : index
    %15 = vector.load %arg2[%c528, %c0_9] : memref<576x128xbf16, #tpu.memory_space<vmem>>, vector<1x128xbf16>
    %16 = arith.extf %15 : vector<1x128xbf16> to vector<1x128xf32>
    %17 = vector.broadcast %16 : vector<1x128xf32> to vector<16x128xf32>
    %18 = arith.addf %14, %17 : vector<16x128xf32>
    %cst_10 = arith.constant 0.00999999977 : f32
    %19 = vector.broadcast %cst_10 : f32 to vector<16x128xf32>
    %20 = arith.mulf %19, %18 : vector<16x128xf32>
    %21 = arith.maximumf %18, %20 : vector<16x128xf32>
    %22 = arith.truncf %21 : vector<16x128xf32> to vector<16x128xbf16>
    %cst_11 = arith.constant dense<0.000000e+00> : vector<16x128xf32>
    %23 = tpu.matmul %22, %2, %cst_11 {dimension_numbers = #tpu.dot_dimension_numbers<[1], [0], [0], [1], [0, 0, 1, 1], [], []>} : vector<16x128xbf16>, vector<128x128xbf16>, vector<16x128xf32> -> vector<16x128xf32>
    %c544 = arith.constant 544 : index
    %c0_12 = arith.constant 0 : index
    %24 = vector.load %arg2[%c544, %c0_12] : memref<576x128xbf16, #tpu.memory_space<vmem>>, vector<1x128xbf16>
    %25 = arith.extf %24 : vector<1x128xbf16> to vector<1x128xf32>
    %26 = vector.broadcast %25 : vector<1x128xf32> to vector<16x128xf32>
    %27 = arith.addf %23, %26 : vector<16x128xf32>
    %cst_13 = arith.constant 0.00999999977 : f32
    %28 = vector.broadcast %cst_13 : f32 to vector<16x128xf32>
    %29 = arith.mulf %28, %27 : vector<16x128xf32>
    %30 = arith.maximumf %27, %29 : vector<16x128xf32>
    %31 = arith.truncf %30 : vector<16x128xf32> to vector<16x128xbf16>
    %cst_14 = arith.constant dense<0.000000e+00> : vector<16x128xf32>
    %32 = tpu.matmul %31, %3, %cst_14 {dimension_numbers = #tpu.dot_dimension_numbers<[1], [0], [0], [1], [0, 0, 1, 1], [], []>} : vector<16x128xbf16>, vector<128x128xbf16>, vector<16x128xf32> -> vector<16x128xf32>
    %c560 = arith.constant 560 : index
    %c0_15 = arith.constant 0 : index
    %33 = vector.load %arg2[%c560, %c0_15] : memref<576x128xbf16, #tpu.memory_space<vmem>>, vector<1x128xbf16>
    %34 = arith.extf %33 : vector<1x128xbf16> to vector<1x128xf32>
    %35 = vector.broadcast %34 : vector<1x128xf32> to vector<16x128xf32>
    %36 = arith.addf %32, %35 : vector<16x128xf32>
    %37 = tpu.iota {dimensions = array<i32: 1>} : vector<1x128xi32>
    %c2_i32 = arith.constant 2 : i32
    %38 = vector.broadcast %c2_i32 : i32 to vector<1x128xi32>
    %39 = arith.cmpi sge, %37, %38 : vector<1x128xi32>
    %c4_i32 = arith.constant 4 : i32
    %40 = vector.broadcast %c4_i32 : i32 to vector<1x128xi32>
    %41 = arith.cmpi slt, %37, %40 : vector<1x128xi32>
    %42 = arith.andi %39, %41 : vector<1x128xi1>
    %cst_16 = arith.constant -1.000000e+01 : f32
    %cst_17 = arith.constant 2.000000e+00 : f32
    %43 = vector.broadcast %cst_16 : f32 to vector<16x128xf32>
    %44 = arith.maximumf %43, %36 : vector<16x128xf32>
    %45 = vector.broadcast %cst_17 : f32 to vector<16x128xf32>
    %46 = arith.minimumf %45, %44 : vector<16x128xf32>
    %47 = vector.shape_cast %42 : vector<1x128xi1> to vector<1x128xi1>
    %48 = vector.broadcast %47 : vector<1x128xi1> to vector<16x128xi1>
    %49 = arith.select %48, %46, %36 : vector<16x128xi1>, vector<16x128xf32>
    %c0_18 = arith.constant 0 : index
    %c0_19 = arith.constant 0 : index
    %50 = vector.load %arg3[%c0_18, %c0_19] : memref<16x128xf32, #tpu.memory_space<vmem>>, vector<16x128xf32>
    tpu.vector_store %arg3[%c0_18, %c0_19], %49 {strides = array<i32>} : memref<16x128xf32, #tpu.memory_space<vmem>>, vector<16x128xf32>,
    return
  }
  func.func @transform_0(%arg0: i32) -> (i32, i32) {
    %c0_i32 = arith.constant 0 : i32
    %c0_i32_0 = arith.constant 0 : i32
    return %arg0, %c0_i32 : i32, i32
  }
  func.func @transform_1(%arg0: i32) -> (i32, i32) {
    %c0_i32 = arith.constant 0 : i32
    %c0_i32_0 = arith.constant 0 : i32
    %c0_i32_1 = arith.constant 0 : i32
    return %c0_i32, %c0_i32_0 : i32, i32
  }
  func.func @transform_2(%arg0: i32) -> (i32, i32) {
    %c0_i32 = arith.constant 0 : i32
    %c0_i32_0 = arith.constant 0 : i32
    return %arg0, %c0_i32 : i32, i32
  }
}

</mosaic_0001>

<llo_original>
// kernel: tpu_custom_call.1
$region0: #{tpu_custom_call.1}
  #allocation0 [shape = 'u32[]', space=smem, size = 0x4, offset = 0x4, fixed_abs, tag = 'smem constant byte address 0x4 - core index']
  #allocation1 [shape = 'u32[144,128]{1,0:T(1,128)}', space=vmem, size = 0x12000, scoped, tag = 'internal scratch']
  %s0 = inlined_call_operand.hbm [shape: bf16[16,128], index: 0, kind: input, shape index: {}]
  %s1 = inlined_call_operand.hbm [shape: bf16[576,128], index: 1, kind: input, shape index: {}]
  %s2 = inlined_call_operand.hbm [shape: f32[16,128], index: 2, kind: output, shape index: {}]
  %s3 = sld [smem:[#allocation0]]
  $region26: #{tpu_custom_call.1} parent=0
    _
  %s5 = ssub.s32 1, %s3
  %s6 = scalar_select 0, %s5, %s3
  $region1: #{tpu_custom_call.1} parent=0
    #allocation2 [shape = 'u8[4096]{0}', space=vmem, size = 0x1000, scoped, tag = 'input window, operand 0, single buffered']
    #allocation3 [shape = 's32[1]{0}', space=sflag, size = 0x4, scoped, tag = 'scoped memory for tpu_custom_call.1']
    #allocation4 [shape = 's32[1]{0}', space=sflag, size = 0x4, scoped, tag = 'scoped memory for tpu_custom_call.1']
    #allocation5 [shape = 'u8[147456]{0}', space=vmem, size = 0x24000, scoped, tag = 'input window, operand 1, single buffered']
    #allocation6 [shape = 's32[1]{0}', space=sflag, size = 0x4, scoped, tag = 'scoped memory for tpu_custom_call.1']
    #allocation7 [shape = 'u8[8192]{0}', space=vmem, size = 0x2000, scoped, tag = 'output window, operand 0, single buffered']
    %7 = vsyncpa [#allocation3], 0
    %8 = vsyncpa [#allocation6], 0
    %9 = vsyncpa [#allocation4], 0
    // Predicated region
    $region2: #{tpu_custom_call.1} parent=1 // pred_check
      _
    $region3: #{tpu_custom_call.1} parent=1 // pred_check_branch
      %11 = sbr.rel (0) target = $region5
    $region4: #{tpu_custom_call.1} parent=1 // pred_region
      %s13 = ssub.s32 128, 128
      %14 = vsyncadd [#allocation3], %s13
      %s15 = sshll.u32 [#allocation2], 4
      %s16 = int_to_ptr.vmem [resolvable:$true] %s15
      %21 = dma.hbm_to_vmem [thread:$0]  %s0, 128, %s16, [#allocation3], 64, 64, 4
    $region5: #{tpu_custom_call.1} parent=1 // pred_fallthru
      _
    // Predicated region
    $region6: #{tpu_custom_call.1} parent=1 // pred_check
      _
    $region7: #{tpu_custom_call.1} parent=1 // pred_check_branch
      %23 = sbr.rel (0) target = $region9
    $region8: #{tpu_custom_call.1} parent=1 // pred_region
      %s25 = ssub.s32 4608, 4608
      %26 = vsyncadd [#allocation6], %s25
      %s27 = sshll.u32 [#allocation5], 4
      %s28 = int_to_ptr.vmem [resolvable:$true] %s27
      %33 = dma.hbm_to_vmem [thread:$0]  %s1, 4608, %s28, [#allocation6], 64, 64, 4
    $region9: #{tpu_custom_call.1} parent=1 // pred_fallthru
      _
    // Predicated region
    $region10: #{tpu_custom_call.1} parent=1 // pred_check
      _
    $region11: #{tpu_custom_call.1} parent=1 // pred_check_branch
      %35 = sbr.rel (0) target = $region13
    $region12: #{tpu_custom_call.1} parent=1 // pred_region
      %36 = dma.done [#allocation3], 128
    $region13: #{tpu_custom_call.1} parent=1 // pred_fallthru
      _
    // Predicated region
    $region14: #{tpu_custom_call.1} parent=1 // pred_check
      _
    $region15: #{tpu_custom_call.1} parent=1 // pred_check_branch
      %38 = sbr.rel (0) target = $region17
    $region16: #{tpu_custom_call.1} parent=1 // pred_region
      %39 = dma.done [#allocation6], 4608
    $region17: #{tpu_custom_call.1} parent=1 // pred_fallthru
      _
    %v41 = vld [vmem:[#allocation5] sm:$0xf]
    %v42 = vld [vmem:[#allocation5 + $0x4] sm:$0xf]
    %v43 = vld [vmem:[#allocation5 + $0x8] sm:$0xf]
    %v44 = vld [vmem:[#allocation5 + $0xc] sm:$0xf]
    %v45 = vld [vmem:[#allocation5 + $0x10] sm:$0xf]
    %v46 = vld [vmem:[#allocation5 + $0x14] sm:$0xf]
    %v47 = vld [vmem:[#allocation5 + $0x18] sm:$0xf]
    %v48 = vld [vmem:[#allocation5 + $0x1c] sm:$0xf]
    %v49 = vld [vmem:[#allocation5 + $0x20] sm:$0xf]
    %v50 = vld [vmem:[#allocation5 + $0x24] sm:$0xf]
    %v51 = vld [vmem:[#allocation5 + $0x28] sm:$0xf]
    %v52 = vld [vmem:[#allocation5 + $0x2c] sm:$0xf]
    %v53 = vld [vmem:[#allocation5 + $0x30] sm:$0xf]
    %v54 = vld [vmem:[#allocation5 + $0x34] sm:$0xf]
    %v55 = vld [vmem:[#allocation5 + $0x38] sm:$0xf]
    %v56 = vld [vmem:[#allocation5 + $0x3c] sm:$0xf]
    %v57 = vld [vmem:[#allocation5 + $0x40] sm:$0xf]
    %v58 = vld [vmem:[#allocation5 + $0x44] sm:$0xf]
    %v59 = vld [vmem:[#allocation5 + $0x48] sm:$0xf]
    %v60 = vld [vmem:[#allocation5 + $0x4c] sm:$0xf]
    %v61 = vld [vmem:[#allocation5 + $0x50] sm:$0xf]
    %v62 = vld [vmem:[#allocation5 + $0x54] sm:$0xf]
    %v63 = vld [vmem:[#allocation5 + $0x58] sm:$0xf]
    %v64 = vld [vmem:[#allocation5 + $0x5c] sm:$0xf]
    %v65 = vld [vmem:[#allocation5 + $0x60] sm:$0xf]
    %v66 = vld [vmem:[#allocation5 + $0x64] sm:$0xf]
    %v67 = vld [vmem:[#allocation5 + $0x68] sm:$0xf]
    %v68 = vld [vmem:[#allocation5 + $0x6c] sm:$0xf]
    %v69 = vld [vmem:[#allocation5 + $0x70] sm:$0xf]
    %v70 = vld [vmem:[#allocation5 + $0x74] sm:$0xf]
    %v71 = vld [vmem:[#allocation5 + $0x78] sm:$0xf]
    %v72 = vld [vmem:[#allocation5 + $0x7c] sm:$0xf]
    %v73 = vld [vmem:[#allocation5 + $0x80] sm:$0xf]
    %v74 = vld [vmem:[#allocation5 + $0x84] sm:$0xf]
    %v75 = vld [vmem:[#allocation5 + $0x88] sm:$0xf]
    %v76 = vld [vmem:[#allocation5 + $0x8c] sm:$0xf]
    %v77 = vld [vmem:[#allocation5 + $0x90] sm:$0xf]
    %v78 = vld [vmem:[#allocation5 + $0x94] sm:$0xf]
    %v79 = vld [vmem:[#allocation5 + $0x98] sm:$0xf]
    %v80 = vld [vmem:[#allocation5 + $0x9c] sm:$0xf]
    %v81 = vld [vmem:[#allocation5 + $0xa0] sm:$0xf]
    %v82 = vld [vmem:[#allocation5 + $0xa4] sm:$0xf]
    %v83 = vld [vmem:[#allocation5 + $0xa8] sm:$0xf]
    %v84 = vld [vmem:[#allocation5 + $0xac] sm:$0xf]
    %v85 = vld [vmem:[#allocation5 + $0xb0] sm:$0xf]
    %v86 = vld [vmem:[#allocation5 + $0xb4] sm:$0xf]
    %v87 = vld [vmem:[#allocation5 + $0xb8] sm:$0xf]
    %v88 = vld [vmem:[#allocation5 + $0xbc] sm:$0xf]
    %v89 = vld [vmem:[#allocation5 + $0xc0] sm:$0xf]
    %v90 = vld [vmem:[#allocation5 + $0xc4] sm:$0xf]
    %v91 = vld [vmem:[#allocation5 + $0xc8] sm:$0xf]
    %v92 = vld [vmem:[#allocation5 + $0xcc] sm:$0xf]
    %v93 = vld [vmem:[#allocation5 + $0xd0] sm:$0xf]
    %v94 = vld [vmem:[#allocation5 + $0xd4] sm:$0xf]
    %v95 = vld [vmem:[#allocation5 + $0xd8] sm:$0xf]
    %v96 = vld [vmem:[#allocation5 + $0xdc] sm:$0xf]
    %v97 = vld [vmem:[#allocation5 + $0xe0] sm:$0xf]
    %v98 = vld [vmem:[#allocation5 + $0xe4] sm:$0xf]
    %v99 = vld [vmem:[#allocation5 + $0xe8] sm:$0xf]
    %v100 = vld [vmem:[#allocation5 + $0xec] sm:$0xf]
    %v101 = vld [vmem:[#allocation5 + $0xf0] sm:$0xf]
    %v102 = vld [vmem:[#allocation5 + $0xf4] sm:$0xf]
    %v103 = vld [vmem:[#allocation5 + $0xf8] sm:$0xf]
    %v104 = vld [vmem:[#allocation5 + $0xfc] sm:$0xf]
    %v105 = vld [vmem:[#allocation2] sm:$0xf]
    %v106 = vld [vmem:[#allocation2 + $0x4] sm:$0xf]
    %v107 = vld [vmem:[#allocation5 + $0x100] sm:$0x1]
    %v108 = vunpack.c.l.bf16 %v107
    %v109 = vlaneseq
    %v110 = vshrl.u32 %v109, 7
    %v111 = vsub.s32 0, %v110
    %v112 = vrot.slane %v108, %v111
    %v115 = vunpack.c.l.b16 %v105
    %v116 = vunpack.c.l.b16 %v106
    %v117 = vpack.c.b16 %v116, %v115
    %v135 = vunpack.c.l.b16 %v41
    %v136 = vunpack.c.l.b16 %v42
    %v137 = vunpack.c.l.b16 %v43
    %v138 = vunpack.c.l.b16 %v44
    %v139 = vunpack.c.l.b16 %v45
    %v140 = vunpack.c.l.b16 %v46
    %v141 = vunpack.c.l.b16 %v47
    %v142 = vunpack.c.l.b16 %v48
    %v143 = vunpack.c.l.b16 %v49
    %v144 = vunpack.c.l.b16 %v50
    %v145 = vunpack.c.l.b16 %v51
    %v146 = vunpack.c.l.b16 %v52
    %v147 = vunpack.c.l.b16 %v53
    %v148 = vunpack.c.l.b16 %v54
    %v149 = vunpack.c.l.b16 %v55
    %v150 = vunpack.c.l.b16 %v56
    %v151 = vpack.c.b16 %v136, %v135
    %v152 = vpack.c.b16 %v138, %v137
    %v153 = vpack.c.b16 %v140, %v139
    %v154 = vpack.c.b16 %v142, %v141
    %v155 = vpack.c.b16 %v144, %v143
    %v156 = vpack.c.b16 %v146, %v145
    %v157 = vpack.c.b16 %v148, %v147
    %v158 = vpack.c.b16 %v150, %v149
    %167 = vmatprep.subr.bf16.mxu0 0
    %168 = vmatpush1.bf16.msra.mxu0 %v158
    %169 = vmatprep.subr.bf16.mxu0 0
    %170 = vmatpush1.bf16.msra.mxu0 %v157
    %171 = vmatprep.subr.bf16.mxu0 0
    %172 = vmatpush1.bf16.msra.mxu0 %v156
    %173 = vmatprep.subr.bf16.mxu0 0
    %174 = vmatpush1.bf16.msra.mxu0 %v155
    %175 = vmatprep.subr.bf16.mxu0 0
    %176 = vmatpush1.bf16.msra.mxu0 %v154
    %177 = vmatprep.subr.bf16.mxu0 0
    %178 = vmatpush1.bf16.msra.mxu0 %v153
    %179 = vmatprep.subr.bf16.mxu0 0
    %180 = vmatpush1.bf16.msra.mxu0 %v152
    %181 = vmatprep.subr.bf16.mxu0 0
    %182 = vmatpush1.bf16.msra.mxu0 %v151
    %183 = vmatprep.subr.bf16.mxu0 0
    %184 = vmatpush2.bf16.msra.mxu0 0
    %185 = vmatprep.subr.bf16.mxu0 0
    %186 = vmatpush2.bf16.msra.mxu0 0
    %187 = vmatprep.subr.bf16.mxu0 0
    %188 = vmatpush2.bf16.msra.mxu0 0
    %189 = vmatprep.subr.bf16.mxu0 0
    %190 = vmatpush2.bf16.msra.mxu0 0
    %191 = vmatprep.subr.bf16.mxu0 0
    %192 = vmatpush2.bf16.msra.mxu0 0
    %193 = vmatprep.subr.bf16.mxu0 0
    %194 = vmatpush2.bf16.msra.mxu0 0
    %195 = vmatprep.subr.bf16.mxu0 0
    %196 = vmatpush2.bf16.msra.mxu0 0
    %197 = vmatprep.subr.bf16.mxu0 0
    %198 = vmatpush2.bf16.msra.mxu0 0
    %199 = vmatprep.mubr.bf16.mxu0 0
    %200 = vmatmul.mubr.bf16.gmra.mxu0 %v117
    %v201 = vpop.f32.mrf.mxu0
    %v202 = vadd.f32 %v112, %v201
    %v203 = vpop.f32.mrf.mxu0
    %v204 = vpop.f32.mrf.mxu0
    %v205 = vadd.f32 %v112, %v204
    %v206 = vpop.f32.mrf.mxu0
    %207 = vdwg.mxu0
    %v208 = vmul.f32 %v202, 0.01
    %v209 = vmul.f32 %v205, 0.01
    %v210 = vmax.f32 %v202, %v208
    %v211 = vmax.f32 %v205, %v209
    %v212 = vpack.c.bf16 %v211, %v210
    %v213 = vld [vmem:[#allocation5 + $0x108] sm:$0x1]
    %v214 = vunpack.c.l.bf16 %v213
    %v215 = vlaneseq
    %v216 = vshrl.u32 %v215, 7
    %v217 = vsub.s32 0, %v216
    %v218 = vrot.slane %v214, %v217
    %v235 = vunpack.c.l.b16 %v57
    %v236 = vunpack.c.l.b16 %v58
    %v237 = vunpack.c.l.b16 %v59
    %v238 = vunpack.c.l.b16 %v60
    %v239 = vunpack.c.l.b16 %v61
    %v240 = vunpack.c.l.b16 %v62
    %v241 = vunpack.c.l.b16 %v63
    %v242 = vunpack.c.l.b16 %v64
    %v243 = vunpack.c.l.b16 %v65
    %v244 = vunpack.c.l.b16 %v66
    %v245 = vunpack.c.l.b16 %v67
    %v246 = vunpack.c.l.b16 %v68
    %v247 = vunpack.c.l.b16 %v69
    %v248 = vunpack.c.l.b16 %v70
    %v249 = vunpack.c.l.b16 %v71
    %v250 = vunpack.c.l.b16 %v72
    %v251 = vpack.c.b16 %v236, %v235
    %v252 = vpack.c.b16 %v238, %v237
    %v253 = vpack.c.b16 %v240, %v239
    %v254 = vpack.c.b16 %v242, %v241
    %v255 = vpack.c.b16 %v244, %v243
    %v256 = vpack.c.b16 %v246, %v245
    %v257 = vpack.c.b16 %v248, %v247
    %v258 = vpack.c.b16 %v250, %v249
    %267 = vmatprep.subr.bf16.mxu0 0
    %268 = vmatpush1.bf16.msra.mxu0 %v258
    %269 = vmatprep.subr.bf16.mxu0 0
    %270 = vmatpush1.bf16.msra.mxu0 %v257
    %271 = vmatprep.subr.bf16.mxu0 0
    %272 = vmatpush1.bf16.msra.mxu0 %v256
    %273 = vmatprep.subr.bf16.mxu0 0
    %274 = vmatpush1.bf16.msra.mxu0 %v255
    %275 = vmatprep.subr.bf16.mxu0 0
    %276 = vmatpush1.bf16.msra.mxu0 %v254
    %277 = vmatprep.subr.bf16.mxu0 0
    %278 = vmatpush1.bf16.msra.mxu0 %v253
    %279 = vmatprep.subr.bf16.mxu0 0
    %280 = vmatpush1.bf16.msra.mxu0 %v252
    %281 = vmatprep.subr.bf16.mxu0 0
    %282 = vmatpush1.bf16.msra.mxu0 %v251
    %283 = vmatprep.subr.bf16.mxu0 0
    %284 = vmatpush2.bf16.msra.mxu0 0
    %285 = vmatprep.subr.bf16.mxu0 0
    %286 = vmatpush2.bf16.msra.mxu0 0
    %287 = vmatprep.subr.bf16.mxu0 0
    %288 = vmatpush2.bf16.msra.mxu0 0
    %289 = vmatprep.subr.bf16.mxu0 0
    %290 = vmatpush2.bf16.msra.mxu0 0
    %291 = vmatprep.subr.bf16.mxu0 0
    %292 = vmatpush2.bf16.msra.mxu0 0
    %293 = vmatprep.subr.bf16.mxu0 0
    %294 = vmatpush2.bf16.msra.mxu0 0
    %295 = vmatprep.subr.bf16.mxu0 0
    %296 = vmatpush2.bf16.msra.mxu0 0
    %297 = vmatprep.subr.bf16.mxu0 0
    %298 = vmatpush2.bf16.msra.mxu0 0
    %299 = vmatprep.mubr.bf16.mxu0 0
    %300 = vmatmul.mubr.bf16.gmra.mxu0 %v212
    %v301 = vpop.f32.mrf.mxu0
    %v302 = vadd.f32 %v218, %v301
    %v303 = vpop.f32.mrf.mxu0
    %v304 = vpop.f32.mrf.mxu0
    %v305 = vadd.f32 %v218, %v304
    %v306 = vpop.f32.mrf.mxu0
    %307 = vdwg.mxu0
    %v308 = vmul.f32 %v302, 0.01
    %v309 = vmul.f32 %v305, 0.01
    %v310 = vmax.f32 %v302, %v308
    %v311 = vmax.f32 %v305, %v309
    %v312 = vpack.c.bf16 %v311, %v310
    %v313 = vld [vmem:[#allocation5 + $0x110] sm:$0x1]
    %v314 = vunpack.c.l.bf16 %v313
    %v315 = vlaneseq
    %v316 = vshrl.u32 %v315, 7
    %v317 = vsub.s32 0, %v316
    %v318 = vrot.slane %v314, %v317
    %v335 = vunpack.c.l.b16 %v73
    %v336 = vunpack.c.l.b16 %v74
    %v337 = vunpack.c.l.b16 %v75
    %v338 = vunpack.c.l.b16 %v76
    %v339 = vunpack.c.l.b16 %v77
    %v340 = vunpack.c.l.b16 %v78
    %v341 = vunpack.c.l.b16 %v79
    %v342 = vunpack.c.l.b16 %v80
    %v343 = vunpack.c.l.b16 %v81
    %v344 = vunpack.c.l.b16 %v82
    %v345 = vunpack.c.l.b16 %v83
    %v346 = vunpack.c.l.b16 %v84
    %v347 = vunpack.c.l.b16 %v85
    %v348 = vunpack.c.l.b16 %v86
    %v349 = vunpack.c.l.b16 %v87
    %v350 = vunpack.c.l.b16 %v88
    %v351 = vpack.c.b16 %v336, %v335
    %v352 = vpack.c.b16 %v338, %v337
    %v353 = vpack.c.b16 %v340, %v339
    %v354 = vpack.c.b16 %v342, %v341
    %v355 = vpack.c.b16 %v344, %v343
    %v356 = vpack.c.b16 %v346, %v345
    %v357 = vpack.c.b16 %v348, %v347
    %v358 = vpack.c.b16 %v350, %v349
    %367 = vmatprep.subr.bf16.mxu0 0
    %368 = vmatpush1.bf16.msra.mxu0 %v358
    %369 = vmatprep.subr.bf16.mxu0 0
    %370 = vmatpush1.bf16.msra.mxu0 %v357
    %371 = vmatprep.subr.bf16.mxu0 0
    %372 = vmatpush1.bf16.msra.mxu0 %v356
    %373 = vmatprep.subr.bf16.mxu0 0
    %374 = vmatpush1.bf16.msra.mxu0 %v355
    %375 = vmatprep.subr.bf16.mxu0 0
    %376 = vmatpush1.bf16.msra.mxu0 %v354
    %377 = vmatprep.subr.bf16.mxu0 0
    %378 = vmatpush1.bf16.msra.mxu0 %v353
    %379 = vmatprep.subr.bf16.mxu0 0
    %380 = vmatpush1.bf16.msra.mxu0 %v352
    %381 = vmatprep.subr.bf16.mxu0 0
    %382 = vmatpush1.bf16.msra.mxu0 %v351
    %383 = vmatprep.subr.bf16.mxu0 0
    %384 = vmatpush2.bf16.msra.mxu0 0
    %385 = vmatprep.subr.bf16.mxu0 0
    %386 = vmatpush2.bf16.msra.mxu0 0
    %387 = vmatprep.subr.bf16.mxu0 0
    %388 = vmatpush2.bf16.msra.mxu0 0
    %389 = vmatprep.subr.bf16.mxu0 0
    %390 = vmatpush2.bf16.msra.mxu0 0
    %391 = vmatprep.subr.bf16.mxu0 0
    %392 = vmatpush2.bf16.msra.mxu0 0
    %393 = vmatprep.subr.bf16.mxu0 0
    %394 = vmatpush2.bf16.msra.mxu0 0
    %395 = vmatprep.subr.bf16.mxu0 0
    %396 = vmatpush2.bf16.msra.mxu0 0
    %397 = vmatprep.subr.bf16.mxu0 0
    %398 = vmatpush2.bf16.msra.mxu0 0
    %399 = vmatprep.mubr.bf16.mxu0 0
    %400 = vmatmul.mubr.bf16.gmra.mxu0 %v312
    %v401 = vpop.f32.mrf.mxu0
    %v402 = vadd.f32 %v318, %v401
    %v403 = vpop.f32.mrf.mxu0
    %v404 = vpop.f32.mrf.mxu0
    %v405 = vadd.f32 %v318, %v404
    %v406 = vpop.f32.mrf.mxu0
    %407 = vdwg.mxu0
    %v408 = vmul.f32 %v402, 0.01
    %v409 = vmul.f32 %v405, 0.01
    %v410 = vmax.f32 %v402, %v408
    %v411 = vmax.f32 %v405, %v409
    %v412 = vpack.c.bf16 %v411, %v410
    %v413 = vld [vmem:[#allocation5 + $0x118] sm:$0x1]
    %v414 = vunpack.c.l.bf16 %v413
    %v415 = vlaneseq
    %v416 = vshrl.u32 %v415, 7
    %v417 = vsub.s32 0, %v416
    %v418 = vrot.slane %v414, %v417
    %v435 = vunpack.c.l.b16 %v89
    %v436 = vunpack.c.l.b16 %v90
    %v437 = vunpack.c.l.b16 %v91
    %v438 = vunpack.c.l.b16 %v92
    %v439 = vunpack.c.l.b16 %v93
    %v440 = vunpack.c.l.b16 %v94
    %v441 = vunpack.c.l.b16 %v95
    %v442 = vunpack.c.l.b16 %v96
    %v443 = vunpack.c.l.b16 %v97
    %v444 = vunpack.c.l.b16 %v98
    %v445 = vunpack.c.l.b16 %v99
    %v446 = vunpack.c.l.b16 %v100
    %v447 = vunpack.c.l.b16 %v101
    %v448 = vunpack.c.l.b16 %v102
    %v449 = vunpack.c.l.b16 %v103
    %v450 = vunpack.c.l.b16 %v104
    %v451 = vpack.c.b16 %v436, %v435
    %v452 = vpack.c.b16 %v438, %v437
    %v453 = vpack.c.b16 %v440, %v439
    %v454 = vpack.c.b16 %v442, %v441
    %v455 = vpack.c.b16 %v444, %v443
    %v456 = vpack.c.b16 %v446, %v445
    %v457 = vpack.c.b16 %v448, %v447
    %v458 = vpack.c.b16 %v450, %v449
    %467 = vmatprep.subr.bf16.mxu0 0
    %468 = vmatpush1.bf16.msra.mxu0 %v458
    %469 = vmatprep.subr.bf16.mxu0 0
    %470 = vmatpush1.bf16.msra.mxu0 %v457
    %471 = vmatprep.subr.bf16.mxu0 0
    %472 = vmatpush1.bf16.msra.mxu0 %v456
    %473 = vmatprep.subr.bf16.mxu0 0
    %474 = vmatpush1.bf16.msra.mxu0 %v455
    %475 = vmatprep.subr.bf16.mxu0 0
    %476 = vmatpush1.bf16.msra.mxu0 %v454
    %477 = vmatprep.subr.bf16.mxu0 0
    %478 = vmatpush1.bf16.msra.mxu0 %v453
    %479 = vmatprep.subr.bf16.mxu0 0
    %480 = vmatpush1.bf16.msra.mxu0 %v452
    %481 = vmatprep.subr.bf16.mxu0 0
    %482 = vmatpush1.bf16.msra.mxu0 %v451
    %483 = vmatprep.subr.bf16.mxu0 0
    %484 = vmatpush2.bf16.msra.mxu0 0
    %485 = vmatprep.subr.bf16.mxu0 0
    %486 = vmatpush2.bf16.msra.mxu0 0
    %487 = vmatprep.subr.bf16.mxu0 0
    %488 = vmatpush2.bf16.msra.mxu0 0
    %489 = vmatprep.subr.bf16.mxu0 0
    %490 = vmatpush2.bf16.msra.mxu0 0
    %491 = vmatprep.subr.bf16.mxu0 0
    %492 = vmatpush2.bf16.msra.mxu0 0
    %493 = vmatprep.subr.bf16.mxu0 0
    %494 = vmatpush2.bf16.msra.mxu0 0
    %495 = vmatprep.subr.bf16.mxu0 0
    %496 = vmatpush2.bf16.msra.mxu0 0
    %497 = vmatprep.subr.bf16.mxu0 0
    %498 = vmatpush2.bf16.msra.mxu0 0
    %499 = vmatprep.mubr.bf16.mxu0 0
    %500 = vmatmul.mubr.bf16.gmra.mxu0 %v412
    %v501 = vpop.f32.mrf.mxu0
    %v502 = vadd.f32 %v418, %v501
    %v503 = vpop.f32.mrf.mxu0
    %v504 = vpop.f32.mrf.mxu0
    %v505 = vadd.f32 %v418, %v504
    %v506 = vpop.f32.mrf.mxu0
    %507 = vdwg.mxu0
    %v508 = vlaneseq
    %v509 = vand.u32 %v508, 127
    %vm510 = vcmp.ge.s32.totalorder %v509, 2
    %vm511 = vcmp.lt.s32.totalorder %v509, 4
    %vm512 = vmand %vm510, %vm511
    %v513 = vmax.f32 %v502, -10.0
    %v514 = vmax.f32 %v505, -10.0
    %v515 = vmin.f32 %v513, 2.0
    %v516 = vmin.f32 %v514, 2.0
    %v517 = vsel %vm512, 1, 0
    %vm518 = vcmp.eq.s32.totalorder %v517, 1
    %v519 = vsel %vm518, %v515, %v502
    %v520 = vsel %vm518, %v516, %v505
    %521 = vst [vmem:[#allocation7] sm:$0xff] %v519
    %522 = vst [vmem:[#allocation7 + $0x8] sm:$0xff] %v520
    // Predicated region
    $region18: #{tpu_custom_call.1} parent=1 // pred_check
      _
    $region19: #{tpu_custom_call.1} parent=1 // pred_check_branch
      %524 = sbr.rel (0) target = $region21
    $region20: #{tpu_custom_call.1} parent=1 // pred_region
      %s526 = ssub.s32 256, 256
      %527 = vsyncadd [#allocation4], %s526
      %s528 = sshll.u32 [#allocation7], 4
      %s529 = int_to_ptr.vmem [resolvable:$true] %s528
      %534 = dma.vmem_to_hbm [thread:$0]  %s529, 256, %s2, [#allocation4], 128, 128, 8
    $region21: #{tpu_custom_call.1} parent=1 // pred_fallthru
      _
    // Predicated region
    $region22: #{tpu_custom_call.1} parent=1 // pred_check
      _
    $region23: #{tpu_custom_call.1} parent=1 // pred_check_branch
      %536 = sbr.rel (0) target = $region25
    $region24: #{tpu_custom_call.1} parent=1 // pred_region
      %537 = dma.done [#allocation4], 256
    $region25: #{tpu_custom_call.1} parent=1 // pred_fallthru
      _
    %538 = vsyncpa [#allocation3], 1
    %539 = vsyncpa [#allocation6], 1
    %540 = vsyncpa [#allocation4], 1

// kernel: tpu_custom_call.1
$region0: #{tpu_custom_call.1}
  #allocation0 [shape = 'u32[]', space=smem, size = 0x4, offset = 0x4, fixed_abs, tag = 'smem constant byte address 0x4 - core index']
  #allocation1 [shape = 'u32[144,128]{1,0:T(1,128)}', space=vmem, size = 0x12000, scoped, tag = 'internal scratch']
  %s0 = inlined_call_operand.hbm [shape: bf16[16,128], index: 0, kind: input, shape index: {}]
  %s1 = inlined_call_operand.hbm [shape: bf16[576,128], index: 1, kind: input, shape index: {}]
  %s2 = inlined_call_operand.hbm [shape: f32[16,128], index: 2, kind: output, shape index: {}]
  %s3 = sld [smem:[#allocation0]]
  $region26: #{tpu_custom_call.1} parent=0
    _
  %s5 = ssub.s32 1, %s3
  %s6 = scalar_select 0, %s5, %s3
  $region1: #{tpu_custom_call.1} parent=0
    #allocation2 [shape = 'u8[4096]{0}', space=vmem, size = 0x1000, scoped, tag = 'input window, operand 0, single buffered']
    #allocation3 [shape = 's32[1]{0}', space=sflag, size = 0x4, scoped, tag = 'scoped memory for tpu_custom_call.1']
    #allocation4 [shape = 's32[1]{0}', space=sflag, size = 0x4, scoped, tag = 'scoped memory for tpu_custom_call.1']
    #allocation5 [shape = 'u8[147456]{0}', space=vmem, size = 0x24000, scoped, tag = 'input window, operand 1, single buffered']
    #allocation6 [shape = 's32[1]{0}', space=sflag, size = 0x4, scoped, tag = 'scoped memory for tpu_custom_call.1']
    #allocation7 [shape = 'u8[8192]{0}', space=vmem, size = 0x2000, scoped, tag = 'output window, operand 0, single buffered']
    %7 = vsyncpa [#allocation3], 0
    %8 = vsyncpa [#allocation6], 0
    %9 = vsyncpa [#allocation4], 0
    // Predicated region
    $region2: #{tpu_custom_call.1} parent=1 // pred_check
      _
    $region3: #{tpu_custom_call.1} parent=1 // pred_check_branch
      %11 = sbr.rel (0) target = $region5
    $region4: #{tpu_custom_call.1} parent=1 // pred_region
      %s13 = ssub.s32 128, 128
      %14 = vsyncadd [#allocation3], %s13
      %s15 = sshll.u32 [#allocation2], 4
      %s16 = int_to_ptr.vmem [resolvable:$true] %s15
      %21 = dma.hbm_to_vmem [thread:$0]  %s0, 128, %s16, [#allocation3], 64, 64, 4
    $region5: #{tpu_custom_call.1} parent=1 // pred_fallthru
      _
    // Predicated region
    $region6: #{tpu_custom_call.1} parent=1 // pred_check
      _
    $region7: #{tpu_custom_call.1} parent=1 // pred_check_branch
      %23 = sbr.rel (0) target = $region9
    $region8: #{tpu_custom_call.1} parent=1 // pred_region
      %s25 = ssub.s32 4608, 4608
      %26 = vsyncadd [#allocation6], %s25
      %s27 = sshll.u32 [#allocation5], 4
      %s28 = int_to_ptr.vmem [resolvable:$true] %s27
      %33 = dma.hbm_to_vmem [thread:$0]  %s1, 4608, %s28, [#allocation6], 64, 64, 4
    $region9: #{tpu_custom_call.1} parent=1 // pred_fallthru
      _
    // Predicated region
    $region10: #{tpu_custom_call.1} parent=1 // pred_check
      _
    $region11: #{tpu_custom_call.1} parent=1 // pred_check_branch
      %35 = sbr.rel (0) target = $region13
    $region12: #{tpu_custom_call.1} parent=1 // pred_region
      %36 = dma.done [#allocation3], 128
    $region13: #{tpu_custom_call.1} parent=1 // pred_fallthru
      _
    // Predicated region
    $region14: #{tpu_custom_call.1} parent=1 // pred_check
      _
    $region15: #{tpu_custom_call.1} parent=1 // pred_check_branch
      %38 = sbr.rel (0) target = $region17
    $region16: #{tpu_custom_call.1} parent=1 // pred_region
      %39 = dma.done [#allocation6], 4608
    $region17: #{tpu_custom_call.1} parent=1 // pred_fallthru
      _
    %v41 = vld [vmem:[#allocation5] sm:$0xf]
    %v42 = vld [vmem:[#allocation5 + $0x4] sm:$0xf]
    %v43 = vld [vmem:[#allocation5 + $0x8] sm:$0xf]
    %v44 = vld [vmem:[#allocation5 + $0xc] sm:$0xf]
    %v45 = vld [vmem:[#allocation5 + $0x10] sm:$0xf]
    %v46 = vld [vmem:[#allocation5 + $0x14] sm:$0xf]
    %v47 = vld [vmem:[#allocation5 + $0x18] sm:$0xf]
    %v48 = vld [vmem:[#allocation5 + $0x1c] sm:$0xf]
    %v49 = vld [vmem:[#allocation5 + $0x20] sm:$0xf]
    %v50 = vld [vmem:[#allocation5 + $0x24] sm:$0xf]
    %v51 = vld [vmem:[#allocation5 + $0x28] sm:$0xf]
    %v52 = vld [vmem:[#allocation5 + $0x2c] sm:$0xf]
    %v53 = vld [vmem:[#allocation5 + $0x30] sm:$0xf]
    %v54 = vld [vmem:[#allocation5 + $0x34] sm:$0xf]
    %v55 = vld [vmem:[#allocation5 + $0x38] sm:$0xf]
    %v56 = vld [vmem:[#allocation5 + $0x3c] sm:$0xf]
    %v57 = vld [vmem:[#allocation5 + $0x40] sm:$0xf]
    %v58 = vld [vmem:[#allocation5 + $0x44] sm:$0xf]
    %v59 = vld [vmem:[#allocation5 + $0x48] sm:$0xf]
    %v60 = vld [vmem:[#allocation5 + $0x4c] sm:$0xf]
    %v61 = vld [vmem:[#allocation5 + $0x50] sm:$0xf]
    %v62 = vld [vmem:[#allocation5 + $0x54] sm:$0xf]
    %v63 = vld [vmem:[#allocation5 + $0x58] sm:$0xf]
    %v64 = vld [vmem:[#allocation5 + $0x5c] sm:$0xf]
    %v65 = vld [vmem:[#allocation5 + $0x60] sm:$0xf]
    %v66 = vld [vmem:[#allocation5 + $0x64] sm:$0xf]
    %v67 = vld [vmem:[#allocation5 + $0x68] sm:$0xf]
    %v68 = vld [vmem:[#allocation5 + $0x6c] sm:$0xf]
    %v69 = vld [vmem:[#allocation5 + $0x70] sm:$0xf]
    %v70 = vld [vmem:[#allocation5 + $0x74] sm:$0xf]
    %v71 = vld [vmem:[#allocation5 + $0x78] sm:$0xf]
    %v72 = vld [vmem:[#allocation5 + $0x7c] sm:$0xf]
    %v73 = vld [vmem:[#allocation5 + $0x80] sm:$0xf]
    %v74 = vld [vmem:[#allocation5 + $0x84] sm:$0xf]
    %v75 = vld [vmem:[#allocation5 + $0x88] sm:$0xf]
    %v76 = vld [vmem:[#allocation5 + $0x8c] sm:$0xf]
    %v77 = vld [vmem:[#allocation5 + $0x90] sm:$0xf]
    %v78 = vld [vmem:[#allocation5 + $0x94] sm:$0xf]
    %v79 = vld [vmem:[#allocation5 + $0x98] sm:$0xf]
    %v80 = vld [vmem:[#allocation5 + $0x9c] sm:$0xf]
    %v81 = vld [vmem:[#allocation5 + $0xa0] sm:$0xf]
    %v82 = vld [vmem:[#allocation5 + $0xa4] sm:$0xf]
    %v83 = vld [vmem:[#allocation5 + $0xa8] sm:$0xf]
    %v84 = vld [vmem:[#allocation5 + $0xac] sm:$0xf]
    %v85 = vld [vmem:[#allocation5 + $0xb0] sm:$0xf]
    %v86 = vld [vmem:[#allocation5 + $0xb4] sm:$0xf]
    %v87 = vld [vmem:[#allocation5 + $0xb8] sm:$0xf]
    %v88 = vld [vmem:[#allocation5 + $0xbc] sm:$0xf]
    %v89 = vld [vmem:[#allocation5 + $0xc0] sm:$0xf]
    %v90 = vld [vmem:[#allocation5 + $0xc4] sm:$0xf]
    %v91 = vld [vmem:[#allocation5 + $0xc8] sm:$0xf]
    %v92 = vld [vmem:[#allocation5 + $0xcc] sm:$0xf]
    %v93 = vld [vmem:[#allocation5 + $0xd0] sm:$0xf]
    %v94 = vld [vmem:[#allocation5 + $0xd4] sm:$0xf]
    %v95 = vld [vmem:[#allocation5 + $0xd8] sm:$0xf]
    %v96 = vld [vmem:[#allocation5 + $0xdc] sm:$0xf]
    %v97 = vld [vmem:[#allocation5 + $0xe0] sm:$0xf]
    %v98 = vld [vmem:[#allocation5 + $0xe4] sm:$0xf]
    %v99 = vld [vmem:[#allocation5 + $0xe8] sm:$0xf]
    %v100 = vld [vmem:[#allocation5 + $0xec] sm:$0xf]
    %v101 = vld [vmem:[#allocation5 + $0xf0] sm:$0xf]
    %v102 = vld [vmem:[#allocation5 + $0xf4] sm:$0xf]
    %v103 = vld [vmem:[#allocation5 + $0xf8] sm:$0xf]
    %v104 = vld [vmem:[#allocation5 + $0xfc] sm:$0xf]
    %v105 = vld [vmem:[#allocation2] sm:$0xf]
    %v106 = vld [vmem:[#allocation2 + $0x4] sm:$0xf]
    %v107 = vld [vmem:[#allocation5 + $0x100] sm:$0x1]
    %v108 = vunpack.c.l.bf16 %v107
    %v109 = vlaneseq
    %v110 = vshrl.u32 %v109, 7
    %v111 = vsub.s32 0, %v110
    %v112 = vrot.slane %v108, %v111
    %v115 = vunpack.c.l.b16 %v105
    %v116 = vunpack.c.l.b16 %v106
    %v117 = vpack.c.b16 %v116, %v115
    %v135 = vunpack.c.l.b16 %v41
    %v136 = vunpack.c.l.b16 %v42
    %v137 = vunpack.c.l.b16 %v43
    %v138 = vunpack.c.l.b16 %v44
    %v139 = vunpack.c.l.b16 %v45
    %v140 = vunpack.c.l.b16 %v46
    %v141 = vunpack.c.l.b16 %v47
    %v142 = vunpack.c.l.b16 %v48
    %v143 = vunpack.c.l.b16 %v49
    %v144 = vunpack.c.l.b16 %v50
    %v145 = vunpack.c.l.b16 %v51
    %v146 = vunpack.c.l.b16 %v52
    %v147 = vunpack.c.l.b16 %v53
    %v148 = vunpack.c.l.b16 %v54
    %v149 = vunpack.c.l.b16 %v55
    %v150 = vunpack.c.l.b16 %v56
    %v151 = vpack.c.b16 %v136, %v135
    %v152 = vpack.c.b16 %v138, %v137
    %v153 = vpack.c.b16 %v140, %v139
    %v154 = vpack.c.b16 %v142, %v141
    %v155 = vpack.c.b16 %v144, %v143
    %v156 = vpack.c.b16 %v146, %v145
    %v157 = vpack.c.b16 %v148, %v147
    %v158 = vpack.c.b16 %v150, %v149
    %167 = vmatprep.subr.bf16.mxu0 0
    %168 = vmatpush1.bf16.msra.mxu0 %v158
    %169 = vmatprep.subr.bf16.mxu0 0
    %170 = vmatpush1.bf16.msra.mxu0 %v157
    %171 = vmatprep.subr.bf16.mxu0 0
    %172 = vmatpush1.bf16.msra.mxu0 %v156
    %173 = vmatprep.subr.bf16.mxu0 0
    %174 = vmatpush1.bf16.msra.mxu0 %v155
    %175 = vmatprep.subr.bf16.mxu0 0
    %176 = vmatpush1.bf16.msra.mxu0 %v154
    %177 = vmatprep.subr.bf16.mxu0 0
    %178 = vmatpush1.bf16.msra.mxu0 %v153
    %179 = vmatprep.subr.bf16.mxu0 0
    %180 = vmatpush1.bf16.msra.mxu0 %v152
    %181 = vmatprep.subr.bf16.mxu0 0
    %182 = vmatpush1.bf16.msra.mxu0 %v151
    %183 = vmatprep.subr.bf16.mxu0 0
    %184 = vmatpush2.bf16.msra.mxu0 0
    %185 = vmatprep.subr.bf16.mxu0 0
    %186 = vmatpush2.bf16.msra.mxu0 0
    %187 = vmatprep.subr.bf16.mxu0 0
    %188 = vmatpush2.bf16.msra.mxu0 0
    %189 = vmatprep.subr.bf16.mxu0 0
    %190 = vmatpush2.bf16.msra.mxu0 0
    %191 = vmatprep.subr.bf16.mxu0 0
    %192 = vmatpush2.bf16.msra.mxu0 0
    %193 = vmatprep.subr.bf16.mxu0 0
    %194 = vmatpush2.bf16.msra.mxu0 0
    %195 = vmatprep.subr.bf16.mxu0 0
    %196 = vmatpush2.bf16.msra.mxu0 0
    %197 = vmatprep.subr.bf16.mxu0 0
    %198 = vmatpush2.bf16.msra.mxu0 0
    %199 = vmatprep.mubr.bf16.mxu0 0
    %200 = vmatmul.mubr.bf16.gmra.mxu0 %v117
    %v201 = vpop.f32.mrf.mxu0
    %v202 = vadd.f32 %v112, %v201
    %v203 = vpop.f32.mrf.mxu0
    %v204 = vpop.f32.mrf.mxu0
    %v205 = vadd.f32 %v112, %v204
    %v206 = vpop.f32.mrf.mxu0
    %207 = vdwg.mxu0
    %v208 = vmul.f32 %v202, 0.01
    %v209 = vmul.f32 %v205, 0.01
    %v210 = vmax.f32 %v202, %v208
    %v211 = vmax.f32 %v205, %v209
    %v212 = vpack.c.bf16 %v211, %v210
    %v213 = vld [vmem:[#allocation5 + $0x108] sm:$0x1]
    %v214 = vunpack.c.l.bf16 %v213
    %v215 = vlaneseq
    %v216 = vshrl.u32 %v215, 7
    %v217 = vsub.s32 0, %v216
    %v218 = vrot.slane %v214, %v217
    %v235 = vunpack.c.l.b16 %v57
    %v236 = vunpack.c.l.b16 %v58
    %v237 = vunpack.c.l.b16 %v59
    %v238 = vunpack.c.l.b16 %v60
    %v239 = vunpack.c.l.b16 %v61
    %v240 = vunpack.c.l.b16 %v62
    %v241 = vunpack.c.l.b16 %v63
    %v242 = vunpack.c.l.b16 %v64
    %v243 = vunpack.c.l.b16 %v65
    %v244 = vunpack.c.l.b16 %v66
    %v245 = vunpack.c.l.b16 %v67
    %v246 = vunpack.c.l.b16 %v68
    %v247 = vunpack.c.l.b16 %v69
    %v248 = vunpack.c.l.b16 %v70
    %v249 = vunpack.c.l.b16 %v71
    %v250 = vunpack.c.l.b16 %v72
    %v251 = vpack.c.b16 %v236, %v235
    %v252 = vpack.c.b16 %v238, %v237
    %v253 = vpack.c.b16 %v240, %v239
    %v254 = vpack.c.b16 %v242, %v241
    %v255 = vpack.c.b16 %v244, %v243
    %v256 = vpack.c.b16 %v246, %v245
    %v257 = vpack.c.b16 %v248, %v247
    %v258 = vpack.c.b16 %v250, %v249
    %267 = vmatprep.subr.bf16.mxu0 0
    %268 = vmatpush1.bf16.msra.mxu0 %v258
    %269 = vmatprep.subr.bf16.mxu0 0
    %270 = vmatpush1.bf16.msra.mxu0 %v257
    %271 = vmatprep.subr.bf16.mxu0 0
    %272 = vmatpush1.bf16.msra.mxu0 %v256
    %273 = vmatprep.subr.bf16.mxu0 0
    %274 = vmatpush1.bf16.msra.mxu0 %v255
    %275 = vmatprep.subr.bf16.mxu0 0
    %276 = vmatpush1.bf16.msra.mxu0 %v254
    %277 = vmatprep.subr.bf16.mxu0 0
    %278 = vmatpush1.bf16.msra.mxu0 %v253
    %279 = vmatprep.subr.bf16.mxu0 0
    %280 = vmatpush1.bf16.msra.mxu0 %v252
    %281 = vmatprep.subr.bf16.mxu0 0
    %282 = vmatpush1.bf16.msra.mxu0 %v251
    %283 = vmatprep.subr.bf16.mxu0 0
    %284 = vmatpush2.bf16.msra.mxu0 0
    %285 = vmatprep.subr.bf16.mxu0 0
    %286 = vmatpush2.bf16.msra.mxu0 0
    %287 = vmatprep.subr.bf16.mxu0 0
    %288 = vmatpush2.bf16.msra.mxu0 0
    %289 = vmatprep.subr.bf16.mxu0 0
    %290 = vmatpush2.bf16.msra.mxu0 0
    %291 = vmatprep.subr.bf16.mxu0 0
    %292 = vmatpush2.bf16.msra.mxu0 0
    %293 = vmatprep.subr.bf16.mxu0 0
    %294 = vmatpush2.bf16.msra.mxu0 0
    %295 = vmatprep.subr.bf16.mxu0 0
    %296 = vmatpush2.bf16.msra.mxu0 0
    %297 = vmatprep.subr.bf16.mxu0 0
    %298 = vmatpush2.bf16.msra.mxu0 0
    %299 = vmatprep.mubr.bf16.mxu0 0
    %300 = vmatmul.mubr.bf16.gmra.mxu0 %v212
    %v301 = vpop.f32.mrf.mxu0
    %v302 = vadd.f32 %v218, %v301
    %v303 = vpop.f32.mrf.mxu0
    %v304 = vpop.f32.mrf.mxu0
    %v305 = vadd.f32 %v218, %v304
    %v306 = vpop.f32.mrf.mxu0
    %307 = vdwg.mxu0
    %v308 = vmul.f32 %v302, 0.01
    %v309 = vmul.f32 %v305, 0.01
    %v310 = vmax.f32 %v302, %v308
    %v311 = vmax.f32 %v305, %v309
    %v312 = vpack.c.bf16 %v311, %v310
    %v313 = vld [vmem:[#allocation5 + $0x110] sm:$0x1]
    %v314 = vunpack.c.l.bf16 %v313
    %v315 = vlaneseq
    %v316 = vshrl.u32 %v315, 7
    %v317 = vsub.s32 0, %v316
    %v318 = vrot.slane %v314, %v317
    %v335 = vunpack.c.l.b16 %v73
    %v336 = vunpack.c.l.b16 %v74
    %v337 = vunpack.c.l.b16 %v75
    %v338 = vunpack.c.l.b16 %v76
    %v339 = vunpack.c.l.b16 %v77
    %v340 = vunpack.c.l.b16 %v78
    %v341 = vunpack.c.l.b16 %v79
    %v342 = vunpack.c.l.b16 %v80
    %v343 = vunpack.c.l.b16 %v81
    %v344 = vunpack.c.l.b16 %v82
    %v345 = vunpack.c.l.b16 %v83
    %v346 = vunpack.c.l.b16 %v84
    %v347 = vunpack.c.l.b16 %v85
    %v348 = vunpack.c.l.b16 %v86
    %v349 = vunpack.c.l.b16 %v87
    %v350 = vunpack.c.l.b16 %v88
    %v351 = vpack.c.b16 %v336, %v335
    %v352 = vpack.c.b16 %v338, %v337
    %v353 = vpack.c.b16 %v340, %v339
    %v354 = vpack.c.b16 %v342, %v341
    %v355 = vpack.c.b16 %v344, %v343
    %v356 = vpack.c.b16 %v346, %v345
    %v357 = vpack.c.b16 %v348, %v347
    %v358 = vpack.c.b16 %v350, %v349
    %367 = vmatprep.subr.bf16.mxu0 0
    %368 = vmatpush1.bf16.msra.mxu0 %v358
    %369 = vmatprep.subr.bf16.mxu0 0
    %370 = vmatpush1.bf16.msra.mxu0 %v357
    %371 = vmatprep.subr.bf16.mxu0 0
    %372 = vmatpush1.bf16.msra.mxu0 %v356
    %373 = vmatprep.subr.bf16.mxu0 0
    %374 = vmatpush1.bf16.msra.mxu0 %v355
    %375 = vmatprep.subr.bf16.mxu0 0
    %376 = vmatpush1.bf16.msra.mxu0 %v354
    %377 = vmatprep.subr.bf16.mxu0 0
    %378 = vmatpush1.bf16.msra.mxu0 %v353
    %379 = vmatprep.subr.bf16.mxu0 0
    %380 = vmatpush1.bf16.msra.mxu0 %v352
    %381 = vmatprep.subr.bf16.mxu0 0
    %382 = vmatpush1.bf16.msra.mxu0 %v351
    %383 = vmatprep.subr.bf16.mxu0 0
    %384 = vmatpush2.bf16.msra.mxu0 0
    %385 = vmatprep.subr.bf16.mxu0 0
    %386 = vmatpush2.bf16.msra.mxu0 0
    %387 = vmatprep.subr.bf16.mxu0 0
    %388 = vmatpush2.bf16.msra.mxu0 0
    %389 = vmatprep.subr.bf16.mxu0 0
    %390 = vmatpush2.bf16.msra.mxu0 0
    %391 = vmatprep.subr.bf16.mxu0 0
    %392 = vmatpush2.bf16.msra.mxu0 0
    %393 = vmatprep.subr.bf16.mxu0 0
    %394 = vmatpush2.bf16.msra.mxu0 0
    %395 = vmatprep.subr.bf16.mxu0 0
    %396 = vmatpush2.bf16.msra.mxu0 0
    %397 = vmatprep.subr.bf16.mxu0 0
    %398 = vmatpush2.bf16.msra.mxu0 0
    %399 = vmatprep.mubr.bf16.mxu0 0
    %400 = vmatmul.mubr.bf16.gmra.mxu0 %v312
    %v401 = vpop.f32.mrf.mxu0
    %v402 = vadd.f32 %v318, %v401
    %v403 = vpop.f32.mrf.mxu0
    %v404 = vpop.f32.mrf.mxu0
    %v405 = vadd.f32 %v318, %v404
    %v406 = vpop.f32.mrf.mxu0
    %407 = vdwg.mxu0
    %v408 = vmul.f32 %v402, 0.01
    %v409 = vmul.f32 %v405, 0.01
    %v410 = vmax.f32 %v402, %v408
    %v411 = vmax.f32 %v405, %v409
    %v412 = vpack.c.bf16 %v411, %v410
    %v413 = vld [vmem:[#allocation5 + $0x118] sm:$0x1]
    %v414 = vunpack.c.l.bf16 %v413
    %v415 = vlaneseq
    %v416 = vshrl.u32 %v415, 7
    %v417 = vsub.s32 0, %v416
    %v418 = vrot.slane %v414, %v417
    %v435 = vunpack.c.l.b16 %v89
    %v436 = vunpack.c.l.b16 %v90
    %v437 = vunpack.c.l.b16 %v91
    %v438 = vunpack.c.l.b16 %v92
    %v439 = vunpack.c.l.b16 %v93
    %v440 = vunpack.c.l.b16 %v94
    %v441 = vunpack.c.l.b16 %v95
    %v442 = vunpack.c.l.b16 %v96
    %v443 = vunpack.c.l.b16 %v97
    %v444 = vunpack.c.l.b16 %v98
    %v445 = vunpack.c.l.b16 %v99
    %v446 = vunpack.c.l.b16 %v100
    %v447 = vunpack.c.l.b16 %v101
    %v448 = vunpack.c.l.b16 %v102
    %v449 = vunpack.c.l.b16 %v103
    %v450 = vunpack.c.l.b16 %v104
    %v451 = vpack.c.b16 %v436, %v435
    %v452 = vpack.c.b16 %v438, %v437
    %v453 = vpack.c.b16 %v440, %v439
    %v454 = vpack.c.b16 %v442, %v441
    %v455 = vpack.c.b16 %v444, %v443
    %v456 = vpack.c.b16 %v446, %v445
    %v457 = vpack.c.b16 %v448, %v447
    %v458 = vpack.c.b16 %v450, %v449
    %467 = vmatprep.subr.bf16.mxu0 0
    %468 = vmatpush1.bf16.msra.mxu0 %v458
    %469 = vmatprep.subr.bf16.mxu0 0
    %470 = vmatpush1.bf16.msra.mxu0 %v457
    %471 = vmatprep.subr.bf16.mxu0 0
    %472 = vmatpush1.bf16.msra.mxu0 %v456
    %473 = vmatprep.subr.bf16.mxu0 0
    %474 = vmatpush1.bf16.msra.mxu0 %v455
    %475 = vmatprep.subr.bf16.mxu0 0
    %476 = vmatpush1.bf16.msra.mxu0 %v454
    %477 = vmatprep.subr.bf16.mxu0 0
    %478 = vmatpush1.bf16.msra.mxu0 %v453
    %479 = vmatprep.subr.bf16.mxu0 0
    %480 = vmatpush1.bf16.msra.mxu0 %v452
    %481 = vmatprep.subr.bf16.mxu0 0
    %482 = vmatpush1.bf16.msra.mxu0 %v451
    %483 = vmatprep.subr.bf16.mxu0 0
    %484 = vmatpush2.bf16.msra.mxu0 0
    %485 = vmatprep.subr.bf16.mxu0 0
    %486 = vmatpush2.bf16.msra.mxu0 0
    %487 = vmatprep.subr.bf16.mxu0 0
    %488 = vmatpush2.bf16.msra.mxu0 0
    %489 = vmatprep.subr.bf16.mxu0 0
    %490 = vmatpush2.bf16.msra.mxu0 0
    %491 = vmatprep.subr.bf16.mxu0 0
    %492 = vmatpush2.bf16.msra.mxu0 0
    %493 = vmatprep.subr.bf16.mxu0 0
    %494 = vmatpush2.bf16.msra.mxu0 0
    %495 = vmatprep.subr.bf16.mxu0 0
    %496 = vmatpush2.bf16.msra.mxu0 0
    %497 = vmatprep.subr.bf16.mxu0 0
    %498 = vmatpush2.bf16.msra.mxu0 0
    %499 = vmatprep.mubr.bf16.mxu0 0
    %500 = vmatmul.mubr.bf16.gmra.mxu0 %v412
    %v501 = vpop.f32.mrf.mxu0
    %v502 = vadd.f32 %v418, %v501
    %v503 = vpop.f32.mrf.mxu0
    %v504 = vpop.f32.mrf.mxu0
    %v505 = vadd.f32 %v418, %v504
    %v506 = vpop.f32.mrf.mxu0
    %507 = vdwg.mxu0
    %v508 = vlaneseq
    %v509 = vand.u32 %v508, 127
    %vm510 = vcmp.ge.s32.totalorder %v509, 2
    %vm511 = vcmp.lt.s32.totalorder %v509, 4
    %vm512 = vmand %vm510, %vm511
    %v513 = vmax.f32 %v502, -10.0
    %v514 = vmax.f32 %v505, -10.0
    %v515 = vmin.f32 %v513, 2.0
    %v516 = vmin.f32 %v514, 2.0
    %v517 = vsel %vm512, 1, 0
    %vm518 = vcmp.eq.s32.totalorder %v517, 1
    %v519 = vsel %vm518, %v515, %v502
    %v520 = vsel %vm518, %v516, %v505
    %521 = vst [vmem:[#allocation7] sm:$0xff] %v519
    %522 = vst [vmem:[#allocation7 + $0x8] sm:$0xff] %v520
    // Predicated region
    $region18: #{tpu_custom_call.1} parent=1 // pred_check
      _
    $region19: #{tpu_custom_call.1} parent=1 // pred_check_branch
      %524 = sbr.rel (0) target = $region21
    $region20: #{tpu_custom_call.1} parent=1 // pred_region
      %s526 = ssub.s32 256, 256
      %527 = vsyncadd [#allocation4], %s526
      %s528 = sshll.u32 [#allocation7], 4
      %s529 = int_to_ptr.vmem [resolvable:$true] %s528
      %534 = dma.vmem_to_hbm [thread:$0]  %s529, 256, %s2, [#allocation4], 128, 128, 8
    $region21: #{tpu_custom_call.1} parent=1 // pred_fallthru
      _
    // Predicated region
    $region22: #{tpu_custom_call.1} parent=1 // pred_check
      _
    $region23: #{tpu_custom_call.1} parent=1 // pred_check_branch
      %536 = sbr.rel (0) target = $region25
    $region24: #{tpu_custom_call.1} parent=1 // pred_region
      %537 = dma.done [#allocation4], 256
    $region25: #{tpu_custom_call.1} parent=1 // pred_fallthru
      _
    %538 = vsyncpa [#allocation3], 1
    %539 = vsyncpa [#allocation6], 1
    %540 = vsyncpa [#allocation4], 1

</llo_original>
